<compile_context>
chip_gen: v5e
topology: v5e:2x2
jax: 0.10.0
libtpu: 0.0.40
codegen_flags: <defaults>
</compile_context>

<pallas_src>
import math

import jax
import jax.numpy as jnp
from jax.experimental import pallas as pl
from jax.experimental.pallas import tpu as pltpu

LANES = 512        # lane-dense last dim, multiple of 128
SUB = 32           # sublane-group size: multiple of 8/16/32 -> safe for f32/bf16/int8 blocks
TILE_GROUPS = 32   # (32, 32, 512) f32 tile = 2 MiB; 2 inputs x 2 pipeline bufs = 8 MiB
                   # (fits the 32 MiB scoped-VMEM default on v5e/v6e/v7x; v6e has headroom)
N_SPLITS = 2       # outer "parallel" grid axis -> megacore sharding on v7x (2 TCs)


def _dice_partials_kernel(yp_ref, yt_ref, out_ref, inter_acc, p_acc, t_acc):
    k = pl.program_id(1)

    @pl.when(k == 0)
    def _init():
        inter_acc[...] = jnp.zeros_like(inter_acc)
        p_acc[...] = jnp.zeros_like(p_acc)
        t_acc[...] = jnp.zeros_like(t_acc)

    # Cast narrow wire dtypes to f32 inside the kernel (keeps HBM traffic narrow).
    x = yp_ref[...].astype(jnp.float32)      # (tile_groups, SUB, LANES) logits
    t = yt_ref[...].astype(jnp.float32)      # (tile_groups, SUB, LANES) mask
    p = jax.nn.sigmoid(x)

    # Reduce only along the leading (non-tiled) axis: pure vreg-wise VPU adds, no XLU.
    inter_acc[...] += jnp.sum(p * t, axis=0)
    p_acc[...] += jnp.sum(p, axis=0)
    t_acc[...] += jnp.sum(t, axis=0)

    @pl.when(k == pl.num_programs(1) - 1)
    def _finalize():
        out_ref[0, 0] = inter_acc[...]
        out_ref[0, 1] = p_acc[...]
        out_ref[0, 2] = t_acc[...]


def _round_up(x, m):
    return ((x + m - 1) // m) * m


def _pad_flat(x, padded_len, pad_value):
    flat = x.reshape(-1)
    pad = padded_len - flat.shape[0]
    if pad:
        flat = jnp.concatenate(
            [flat, jnp.full((pad,), pad_value, dtype=flat.dtype)])
    return flat


@jax.jit
def dice_loss(y_pred, y_true):
    """smp binary DiceLoss(from_logits=True).

    y_pred: (N, 1, H, W) logits (any float dtype, passed at native width).
    y_true: (N, 1, H, W) binary mask (any numeric dtype, passed at native width).
    Returns a scalar f32 loss.
    """
    assert y_pred.shape == y_true.shape
    assert y_pred.shape[1] == 1, "binary mode expects a single class channel"

    total = math.prod(y_pred.shape)
    elems_per_group = SUB * LANES                      # 16384 elements per (32, 512) group

    n_groups_needed = pl.cdiv(total, elems_per_group)
    tile_groups = min(TILE_GROUPS, n_groups_needed)    # shrink tile for tiny inputs
    n_tiles = pl.cdiv(n_groups_needed, tile_groups)
    n_splits = N_SPLITS if n_tiles >= N_SPLITS else 1
    n_tiles = _round_up(n_tiles, n_splits)
    tiles_per_split = n_tiles // n_splits
    n_groups = n_tiles * tile_groups
    padded_len = n_groups * elems_per_group

    # Padding is exactly neutral for all three sums: sigmoid(-1e9) == 0, mask pad == 0.
    yp3 = _pad_flat(y_pred, padded_len, -1e9).reshape(n_groups, SUB, LANES)
    yt3 = _pad_flat(y_true, padded_len, 0).reshape(n_groups, SUB, LANES)

    def _in_map(s, k):
        return (s * tiles_per_split + k, 0, 0)

    def _out_map(s, k):
        return (s, 0, 0, 0)

    partials = pl.pallas_call(
        _dice_partials_kernel,
        out_shape=jax.ShapeDtypeStruct((n_splits, 3, SUB, LANES), jnp.float32),
        grid_spec=pltpu.PrefetchScalarGridSpec(
            num_scalar_prefetch=0,
            grid=(n_splits, tiles_per_split),
            in_specs=[
                pl.BlockSpec((tile_groups, SUB, LANES), _in_map),
                pl.BlockSpec((tile_groups, SUB, LANES), _in_map),
            ],
            out_specs=pl.BlockSpec((1, 3, SUB, LANES), _out_map),
            scratch_shapes=[
                pltpu.VMEM((SUB, LANES), jnp.float32),   # inter accumulator
                pltpu.VMEM((SUB, LANES), jnp.float32),   # sum(p) accumulator
                pltpu.VMEM((SUB, LANES), jnp.float32),   # sum(t) accumulator
            ],
        ),
        compiler_params=pltpu.CompilerParams(
            dimension_semantics=("parallel", "arbitrary")),
    )(yp3, yt3)

    # Tiny final combine in plain JAX: reduce the per-split vector partials to 3 scalars
    # and apply the dice epilogue (runs once over a few KiB; negligible).
    sums = jnp.sum(partials, axis=(0, 2, 3))            # [inter, sum_p, sum_t]
    inter, sum_p, sum_t = sums[0], sums[1], sums[2]
    card = sum_p + sum_t
    dice = (2.0 * inter) / jnp.maximum(card, jnp.float32(1e-7))
    loss = jnp.where(sum_t > 0.0, 1.0 - dice, jnp.float32(0.0))
    return loss


def _reference_dice_loss(y_pred, y_true):
    # Pure-JAX reference of smp binary DiceLoss(from_logits=True).
    p = jax.nn.sigmoid(y_pred.astype(jnp.float32)).reshape(-1)
    t = y_true.astype(jnp.float32).reshape(-1)
    inter = jnp.sum(p * t)
    card = jnp.sum(p) + jnp.sum(t)
    dice = 2.0 * inter / jnp.maximum(card, 1e-7)
    loss = (1.0 - dice) * (jnp.sum(t) > 0.0)
    return loss


if __name__ == "__main__":
    key = jax.random.PRNGKey(0)
    k1, k2 = jax.random.split(key)

    # Small, module-consistent shapes: N=2, C=1 (binary), H=W=16.
    # Narrow dtypes on the wire (bf16 logits, bf16 {0,1} mask); f32 cast happens in-kernel.
    y_pred = jax.random.normal(k1, (2, 1, 16, 16), dtype=jnp.bfloat16)
    y_true = (jax.random.uniform(k2, (2, 1, 16, 16)) > 0.5).astype(jnp.bfloat16)

    loss = dice_loss(y_pred, y_true)
    jax.block_until_ready(loss)

    ref = _reference_dice_loss(y_pred, y_true)
    assert jnp.allclose(loss, ref, atol=1e-5, rtol=1e-5), (loss, ref)

    print("KERNEL_OK")
</pallas_src>

<mosaic_0001>
module attributes {stable_mosaic.version = 11 : i64} {
  func.func @_dice_partials_kernel(%arg0: i32, %arg1: i32, %arg2: memref<1x32x512xbf16, #tpu.memory_space<vmem>>, %arg3: memref<1x32x512xbf16, #tpu.memory_space<vmem>>, %arg4: memref<1x3x32x512xf32, #tpu.memory_space<vmem>>, %arg5: memref<32x512xf32, #tpu.memory_space<vmem>>, %arg6: memref<32x512xf32, #tpu.memory_space<vmem>>, %arg7: memref<32x512xf32, #tpu.memory_space<vmem>>) attributes {dimension_semantics = [#tpu.dimension_semantics<parallel>, #tpu.dimension_semantics<arbitrary>], iteration_bounds = array<i64: 1, 1>, scalar_prefetch = 0 : i64, scratch_operands = 3 : i64, tpu.core_type = #tpu.core_type<tc>, window_params = [{transform_indices = @transform_0, window_bounds = array<i64: 1, 32, 512>}, {transform_indices = @transform_1, window_bounds = array<i64: 1, 32, 512>}, {transform_indices = @transform_2, window_bounds = array<i64: 1, 3, 32, 512>}]} {
    %c0_i32 = arith.constant 0 : i32
    %0 = arith.cmpi eq, %arg1, %c0_i32 : i32
    %1 = arith.extui %0 : i1 to i32
    %c0_i32_0 = arith.constant 0 : i32
    %2 = arith.cmpi ne, %1, %c0_i32_0 : i32
    scf.if %2 {
      %cst_23 = arith.constant 0.000000e+00 : f32
      %28 = vector.broadcast %cst_23 : f32 to vector<32x512xf32>
      %c0_24 = arith.constant 0 : index
      %c0_25 = arith.constant 0 : index
      %29 = vector.load %arg5[%c0_24, %c0_25] : memref<32x512xf32, #tpu.memory_space<vmem>>, vector<32x512xf32>
      tpu.vector_store %arg5[%c0_24, %c0_25], %28 {strides = array<i32>} : memref<32x512xf32, #tpu.memory_space<vmem>>, vector<32x512xf32>,
      %cst_26 = arith.constant 0.000000e+00 : f32
      %30 = vector.broadcast %cst_26 : f32 to vector<32x512xf32>
      %c0_27 = arith.constant 0 : index
      %c0_28 = arith.constant 0 : index
      %31 = vector.load %arg6[%c0_27, %c0_28] : memref<32x512xf32, #tpu.memory_space<vmem>>, vector<32x512xf32>
      tpu.vector_store %arg6[%c0_27, %c0_28], %30 {strides = array<i32>} : memref<32x512xf32, #tpu.memory_space<vmem>>, vector<32x512xf32>,
      %cst_29 = arith.constant 0.000000e+00 : f32
      %32 = vector.broadcast %cst_29 : f32 to vector<32x512xf32>
      %c0_30 = arith.constant 0 : index
      %c0_31 = arith.constant 0 : index
      %33 = vector.load %arg7[%c0_30, %c0_31] : memref<32x512xf32, #tpu.memory_space<vmem>>, vector<32x512xf32>
      tpu.vector_store %arg7[%c0_30, %c0_31], %32 {strides = array<i32>} : memref<32x512xf32, #tpu.memory_space<vmem>>, vector<32x512xf32>,
    } else {
    }
    %c0 = arith.constant 0 : index
    %c0_1 = arith.constant 0 : index
    %c0_2 = arith.constant 0 : index
    %3 = vector.load %arg2[%c0, %c0_1, %c0_2] : memref<1x32x512xbf16, #tpu.memory_space<vmem>>, vector<1x32x512xbf16>
    %4 = arith.extf %3 : vector<1x32x512xbf16> to vector<1x32x512xf32>
    %c0_3 = arith.constant 0 : index
    %c0_4 = arith.constant 0 : index
    %c0_5 = arith.constant 0 : index
    %5 = vector.load %arg3[%c0_3, %c0_4, %c0_5] : memref<1x32x512xbf16, #tpu.memory_space<vmem>>, vector<1x32x512xbf16>
    %6 = arith.extf %5 : vector<1x32x512xbf16> to vector<1x32x512xf32>
    %7 = arith.negf %4 : vector<1x32x512xf32>
    %8 = math.exp %7 : vector<1x32x512xf32>
    %cst = arith.constant 1.000000e+00 : f32
    %9 = vector.broadcast %cst : f32 to vector<1x32x512xf32>
    %10 = arith.addf %9, %8 : vector<1x32x512xf32>
    %11 = arith.divf %9, %10 : vector<1x32x512xf32>
    %c0_6 = arith.constant 0 : index
    %c0_7 = arith.constant 0 : index
    %12 = vector.load %arg5[%c0_6, %c0_7] : memref<32x512xf32, #tpu.memory_space<vmem>>, vector<32x512xf32>
    %13 = arith.mulf %11, %6 : vector<1x32x512xf32>
    %cst_8 = arith.constant dense<0.000000e+00> : vector<32x512xf32>
    %14 = vector.multi_reduction <add>, %13, %cst_8 [0] : vector<1x32x512xf32> to vector<32x512xf32>
    %15 = arith.addf %12, %14 : vector<32x512xf32>
    %c0_9 = arith.constant 0 : index
    %c0_10 = arith.constant 0 : index
    %16 = vector.load %arg5[%c0_9, %c0_10] : memref<32x512xf32, #tpu.memory_space<vmem>>, vector<32x512xf32>
    tpu.vector_store %arg5[%c0_9, %c0_10], %15 {strides = array<i32>} : memref<32x512xf32, #tpu.memory_space<vmem>>, vector<32x512xf32>,
    %c0_11 = arith.constant 0 : index
    %c0_12 = arith.constant 0 : index
    %17 = vector.load %arg6[%c0_11, %c0_12] : memref<32x512xf32, #tpu.memory_space<vmem>>, vector<32x512xf32>
    %cst_13 = arith.constant dense<0.000000e+00> : vector<32x512xf32>
    %18 = vector.multi_reduction <add>, %11, %cst_13 [0] : vector<1x32x512xf32> to vector<32x512xf32>
    %19 = arith.addf %17, %18 : vector<32x512xf32>
    %c0_14 = arith.constant 0 : index
    %c0_15 = arith.constant 0 : index
    %20 = vector.load %arg6[%c0_14, %c0_15] : memref<32x512xf32, #tpu.memory_space<vmem>>, vector<32x512xf32>
    tpu.vector_store %arg6[%c0_14, %c0_15], %19 {strides = array<i32>} : memref<32x512xf32, #tpu.memory_space<vmem>>, vector<32x512xf32>,
    %c0_16 = arith.constant 0 : index
    %c0_17 = arith.constant 0 : index
    %21 = vector.load %arg7[%c0_16, %c0_17] : memref<32x512xf32, #tpu.memory_space<vmem>>, vector<32x512xf32>
    %cst_18 = arith.constant dense<0.000000e+00> : vector<32x512xf32>
    %22 = vector.multi_reduction <add>, %6, %cst_18 [0] : vector<1x32x512xf32> to vector<32x512xf32>
    %23 = arith.addf %21, %22 : vector<32x512xf32>
    %c0_19 = arith.constant 0 : index
    %c0_20 = arith.constant 0 : index
    %24 = vector.load %arg7[%c0_19, %c0_20] : memref<32x512xf32, #tpu.memory_space<vmem>>, vector<32x512xf32>
    tpu.vector_store %arg7[%c0_19, %c0_20], %23 {strides = array<i32>} : memref<32x512xf32, #tpu.memory_space<vmem>>, vector<32x512xf32>,
    %c0_i32_21 = arith.constant 0 : i32
    %25 = arith.cmpi eq, %arg1, %c0_i32_21 : i32
    %26 = arith.extui %25 : i1 to i32
    %c0_i32_22 = arith.constant 0 : i32
    %27 = arith.cmpi ne, %26, %c0_i32_22 : i32
    scf.if %27 {
      %c0_23 = arith.constant 0 : index
      %c0_24 = arith.constant 0 : index
      %28 = vector.load %arg5[%c0_23, %c0_24] : memref<32x512xf32, #tpu.memory_space<vmem>>, vector<32x512xf32>
      %c0_25 = arith.constant 0 : index
      %c0_26 = arith.constant 0 : index
      %c0_27 = arith.constant 0 : index
      %c0_28 = arith.constant 0 : index
      %29 = vector.load %arg4[%c0_25, %c0_26, %c0_27, %c0_28] : memref<1x3x32x512xf32, #tpu.memory_space<vmem>>, vector<1x1x32x512xf32>
      %30 = vector.shape_cast %29 : vector<1x1x32x512xf32> to vector<32x512xf32>
      %31 = vector.shape_cast %28 : vector<32x512xf32> to vector<1x1x32x512xf32>
      tpu.vector_store %arg4[%c0_25, %c0_26, %c0_27, %c0_28], %31 {strides = array<i32>} : memref<1x3x32x512xf32, #tpu.memory_space<vmem>>, vector<1x1x32x512xf32>,
      %c0_29 = arith.constant 0 : index
      %c0_30 = arith.constant 0 : index
      %32 = vector.load %arg6[%c0_29, %c0_30] : memref<32x512xf32, #tpu.memory_space<vmem>>, vector<32x512xf32>
      %c0_31 = arith.constant 0 : index
      %c1 = arith.constant 1 : index
      %c0_32 = arith.constant 0 : index
      %c0_33 = arith.constant 0 : index
      %33 = vector.load %arg4[%c0_31, %c1, %c0_32, %c0_33] : memref<1x3x32x512xf32, #tpu.memory_space<vmem>>, vector<1x1x32x512xf32>
      %34 = vector.shape_cast %33 : vector<1x1x32x512xf32> to vector<32x512xf32>
      %35 = vector.shape_cast %32 : vector<32x512xf32> to vector<1x1x32x512xf32>
      tpu.vector_store %arg4[%c0_31, %c1, %c0_32, %c0_33], %35 {strides = array<i32>} : memref<1x3x32x512xf32, #tpu.memory_space<vmem>>, vector<1x1x32x512xf32>,
      %c0_34 = arith.constant 0 : index
      %c0_35 = arith.constant 0 : index
      %36 = vector.load %arg7[%c0_34, %c0_35] : memref<32x512xf32, #tpu.memory_space<vmem>>, vector<32x512xf32>
      %c0_36 = arith.constant 0 : index
      %c2 = arith.constant 2 : index
      %c0_37 = arith.constant 0 : index
      %c0_38 = arith.constant 0 : index
      %37 = vector.load %arg4[%c0_36, %c2, %c0_37, %c0_38] : memref<1x3x32x512xf32, #tpu.memory_space<vmem>>, vector<1x1x32x512xf32>
      %38 = vector.shape_cast %37 : vector<1x1x32x512xf32> to vector<32x512xf32>
      %39 = vector.shape_cast %36 : vector<32x512xf32> to vector<1x1x32x512xf32>
      tpu.vector_store %arg4[%c0_36, %c2, %c0_37, %c0_38], %39 {strides = array<i32>} : memref<1x3x32x512xf32, #tpu.memory_space<vmem>>, vector<1x1x32x512xf32>,
    } else {
    }
    return
  }
  func.func @transform_0(%arg0: i32, %arg1: i32) -> (i32, i32, i32) {
    %c1_i32 = arith.constant 1 : i32
    %0 = arith.muli %arg0, %c1_i32 : i32
    %1 = arith.addi %0, %arg1 : i32
    %c0_i32 = arith.constant 0 : i32
    %c0_i32_0 = arith.constant 0 : i32
    %c0_i32_1 = arith.constant 0 : i32
    return %1, %c0_i32, %c0_i32_0 : i32, i32, i32
  }
  func.func @transform_1(%arg0: i32, %arg1: i32) -> (i32, i32, i32) {
    %c1_i32 = arith.constant 1 : i32
    %0 = arith.muli %arg0, %c1_i32 : i32
    %1 = arith.addi %0, %arg1 : i32
    %c0_i32 = arith.constant 0 : i32
    %c0_i32_0 = arith.constant 0 : i32
    %c0_i32_1 = arith.constant 0 : i32
    return %1, %c0_i32, %c0_i32_0 : i32, i32, i32
  }
  func.func @transform_2(%arg0: i32, %arg1: i32) -> (i32, i32, i32, i32) {
    %c0_i32 = arith.constant 0 : i32
    %c0_i32_0 = arith.constant 0 : i32
    %c0_i32_1 = arith.constant 0 : i32
    %c0_i32_2 = arith.constant 0 : i32
    return %arg0, %c0_i32, %c0_i32_0, %c0_i32_1 : i32, i32, i32, i32
  }
}

</mosaic_0001>

<llo_original>
// kernel: dice_loss.1
$region0: #{dice_loss.1}
  #allocation0 [shape = 'u32[]', space=smem, size = 0x4, offset = 0x4, fixed_abs, tag = 'smem constant byte address 0x4 - core index']
  #allocation1 [shape = 'u32[72,128]{1,0:T(1,128)}', space=vmem, size = 0x9000, scoped, tag = 'internal scratch']
  #allocation2 [shape = 'f32[32,512]{1,0:T(8,128)}', space=vmem, size = 0x10000, scoped, tag = 'scratch operand']
  #allocation3 [shape = 'f32[32,512]{1,0:T(8,128)}', space=vmem, size = 0x10000, scoped, tag = 'scratch operand']
  #allocation4 [shape = 'f32[32,512]{1,0:T(8,128)}', space=vmem, size = 0x10000, scoped, tag = 'scratch operand']
  %s0 = inlined_call_operand.vmem [shape: bf16[1,32,512], index: 0, kind: input, shape index: {}]
  %s1 = inlined_call_operand.vmem [shape: bf16[1,32,512], index: 1, kind: input, shape index: {}]
  %s2 = inlined_call_operand.vmem [shape: f32[1,3,32,512], index: 2, kind: output, shape index: {}]
  %s3 = sld [smem:[#allocation0]]
  $region26: #{dice_loss.1} parent=0
    _
  %s5 = ssub.s32 1, %s3
  %s6 = scalar_select 0, %s5, %s3
  // Predicated region
  $region2: #{dice_loss.1} parent=0 // pred_check
    _
  $region3: #{dice_loss.1} parent=0 // pred_check_branch
    %8 = sbr.rel (0) target = $region5
  $region4: #{dice_loss.1} parent=0 // pred_region
    %s9 = sadd.s32 0, 0
    %p10 = scmp.lt.s32.totalorder %s9, 0
    %s11 = scalar_select %p10, %s9, 0
    %s12 = smul.addr %s11, 16
    %s13 = smul.addr %s12, 4
    %s14 = scalar_lea.vmem %s0, %s13
    %s15 = sadd.s32 0, 0
  $region5: #{dice_loss.1} parent=0 // pred_fallthru
    _
  // Predicated region
  $region6: #{dice_loss.1} parent=0 // pred_check
    _
  $region7: #{dice_loss.1} parent=0 // pred_check_branch
    %17 = sbr.rel (0) target = $region9
  $region8: #{dice_loss.1} parent=0 // pred_region
    %s18 = sadd.s32 0, 0
    %p19 = scmp.lt.s32.totalorder %s18, 0
    %s20 = scalar_select %p19, %s18, 0
    %s21 = smul.addr %s20, 16
    %s22 = smul.addr %s21, 4
    %s23 = scalar_lea.vmem %s1, %s22
    %s24 = sadd.s32 0, 0
  $region9: #{dice_loss.1} parent=0 // pred_fallthru
    _
  %s25 = sadd.s32 0, 0
  %p26 = scmp.lt.s32.totalorder %s25, 0
  %s27 = scalar_select %p26, %s25, 0
  %s28 = smul.addr %s27, 16
  %s29 = smul.addr %s28, 4
  %s30 = scalar_lea.vmem %s0, %s29
  %s31 = sadd.s32 0, 0
  %p32 = scmp.lt.s32.totalorder %s31, 0
  %s33 = scalar_select %p32, %s31, 0
  %s34 = smul.addr %s33, 16
  %s35 = smul.addr %s34, 4
  %s36 = scalar_lea.vmem %s1, %s35
  %s37 = sadd.s32 0, 0
  %p38 = scmp.lt.s32.totalorder %s37, 0
  %s39 = scalar_select %p38, %s37, 0
  %s40 = smul.addr %s39, 16
  %s41 = smul.addr %s40, 4
  %s42 = scalar_lea.vmem %s0, %s41
  %s43 = sadd.s32 0, 0
  %s44 = sadd.s32 0, 0
  %p45 = scmp.lt.s32.totalorder %s44, 0
  %s46 = scalar_select %p45, %s44, 0
  %s47 = smul.addr %s46, 16
  %s48 = smul.addr %s47, 4
  %s49 = scalar_lea.vmem %s1, %s48
  %s50 = sadd.s32 0, 0
  %p51 = scmp.eq.s32.totalorder 0, 0
  // Predicated region
  $region10: #{dice_loss.1} parent=0 // pred_check
    %p52 = pneg %p51
  $region11: #{dice_loss.1} parent=0 // pred_check_branch
    %54 = sbr.rel (%p52) target = $region13
  $region12: #{dice_loss.1} parent=0 // pred_region
    %55 = vst [vmem:[#allocation2] sm:$0xff] 0.0
    %56 = vst [vmem:[#allocation2 + $0x8] sm:$0xff] 0.0
    %57 = vst [vmem:[#allocation2 + $0x10] sm:$0xff] 0.0
    %58 = vst [vmem:[#allocation2 + $0x18] sm:$0xff] 0.0
    %59 = vst [vmem:[#allocation2 + $0x20] sm:$0xff] 0.0
    %60 = vst [vmem:[#allocation2 + $0x28] sm:$0xff] 0.0
    %61 = vst [vmem:[#allocation2 + $0x30] sm:$0xff] 0.0
    %62 = vst [vmem:[#allocation2 + $0x38] sm:$0xff] 0.0
    %63 = vst [vmem:[#allocation2 + $0x40] sm:$0xff] 0.0
    %64 = vst [vmem:[#allocation2 + $0x48] sm:$0xff] 0.0
    %65 = vst [vmem:[#allocation2 + $0x50] sm:$0xff] 0.0
    %66 = vst [vmem:[#allocation2 + $0x58] sm:$0xff] 0.0
    %67 = vst [vmem:[#allocation2 + $0x60] sm:$0xff] 0.0
    %68 = vst [vmem:[#allocation2 + $0x68] sm:$0xff] 0.0
    %69 = vst [vmem:[#allocation2 + $0x70] sm:$0xff] 0.0
    %70 = vst [vmem:[#allocation2 + $0x78] sm:$0xff] 0.0
    %71 = vst [vmem:[#allocation3] sm:$0xff] 0.0
    %72 = vst [vmem:[#allocation3 + $0x8] sm:$0xff] 0.0
    %73 = vst [vmem:[#allocation3 + $0x10] sm:$0xff] 0.0
    %74 = vst [vmem:[#allocation3 + $0x18] sm:$0xff] 0.0
    %75 = vst [vmem:[#allocation3 + $0x20] sm:$0xff] 0.0
    %76 = vst [vmem:[#allocation3 + $0x28] sm:$0xff] 0.0
    %77 = vst [vmem:[#allocation3 + $0x30] sm:$0xff] 0.0
    %78 = vst [vmem:[#allocation3 + $0x38] sm:$0xff] 0.0
    %79 = vst [vmem:[#allocation3 + $0x40] sm:$0xff] 0.0
    %80 = vst [vmem:[#allocation3 + $0x48] sm:$0xff] 0.0
    %81 = vst [vmem:[#allocation3 + $0x50] sm:$0xff] 0.0
    %82 = vst [vmem:[#allocation3 + $0x58] sm:$0xff] 0.0
    %83 = vst [vmem:[#allocation3 + $0x60] sm:$0xff] 0.0
    %84 = vst [vmem:[#allocation3 + $0x68] sm:$0xff] 0.0
    %85 = vst [vmem:[#allocation3 + $0x70] sm:$0xff] 0.0
    %86 = vst [vmem:[#allocation3 + $0x78] sm:$0xff] 0.0
    %87 = vst [vmem:[#allocation4] sm:$0xff] 0.0
    %88 = vst [vmem:[#allocation4 + $0x8] sm:$0xff] 0.0
    %89 = vst [vmem:[#allocation4 + $0x10] sm:$0xff] 0.0
    %90 = vst [vmem:[#allocation4 + $0x18] sm:$0xff] 0.0
    %91 = vst [vmem:[#allocation4 + $0x20] sm:$0xff] 0.0
    %92 = vst [vmem:[#allocation4 + $0x28] sm:$0xff] 0.0
    %93 = vst [vmem:[#allocation4 + $0x30] sm:$0xff] 0.0
    %94 = vst [vmem:[#allocation4 + $0x38] sm:$0xff] 0.0
    %95 = vst [vmem:[#allocation4 + $0x40] sm:$0xff] 0.0
    %96 = vst [vmem:[#allocation4 + $0x48] sm:$0xff] 0.0
    %97 = vst [vmem:[#allocation4 + $0x50] sm:$0xff] 0.0
    %98 = vst [vmem:[#allocation4 + $0x58] sm:$0xff] 0.0
    %99 = vst [vmem:[#allocation4 + $0x60] sm:$0xff] 0.0
    %100 = vst [vmem:[#allocation4 + $0x68] sm:$0xff] 0.0
    %101 = vst [vmem:[#allocation4 + $0x70] sm:$0xff] 0.0
    %102 = vst [vmem:[#allocation4 + $0x78] sm:$0xff] 0.0
  $region13: #{dice_loss.1} parent=0 // pred_fallthru
    _
  %v103 = vld [vmem:[%s42] sm:$0xff]
  %v104 = vld [vmem:[%s42 + $0x8] sm:$0xff]
  %v105 = vld [vmem:[%s42 + $0x10] sm:$0xff]
  %v106 = vld [vmem:[%s42 + $0x18] sm:$0xff]
  %v107 = vld [vmem:[%s42 + $0x20] sm:$0xff]
  %v108 = vld [vmem:[%s42 + $0x28] sm:$0xff]
  %v109 = vld [vmem:[%s42 + $0x30] sm:$0xff]
  %v110 = vld [vmem:[%s42 + $0x38] sm:$0xff]
  %v111 = vunpack.c.l.bf16 %v103
  %v112 = vunpack.c.h.bf16 %v103
  %v113 = vunpack.c.l.bf16 %v104
  %v114 = vunpack.c.h.bf16 %v104
  %v115 = vunpack.c.l.bf16 %v105
  %v116 = vunpack.c.h.bf16 %v105
  %v117 = vunpack.c.l.bf16 %v106
  %v118 = vunpack.c.h.bf16 %v106
  %v119 = vunpack.c.l.bf16 %v107
  %v120 = vunpack.c.h.bf16 %v107
  %v121 = vunpack.c.l.bf16 %v108
  %v122 = vunpack.c.h.bf16 %v108
  %v123 = vunpack.c.l.bf16 %v109
  %v124 = vunpack.c.h.bf16 %v109
  %v125 = vunpack.c.l.bf16 %v110
  %v126 = vunpack.c.h.bf16 %v110
  %v127 = vld [vmem:[%s49] sm:$0xff]
  %v128 = vld [vmem:[%s49 + $0x8] sm:$0xff]
  %v129 = vld [vmem:[%s49 + $0x10] sm:$0xff]
  %v130 = vld [vmem:[%s49 + $0x18] sm:$0xff]
  %v131 = vld [vmem:[%s49 + $0x20] sm:$0xff]
  %v132 = vld [vmem:[%s49 + $0x28] sm:$0xff]
  %v133 = vld [vmem:[%s49 + $0x30] sm:$0xff]
  %v134 = vld [vmem:[%s49 + $0x38] sm:$0xff]
  %v135 = vunpack.c.l.bf16 %v127
  %v136 = vunpack.c.h.bf16 %v127
  %v137 = vunpack.c.l.bf16 %v128
  %v138 = vunpack.c.h.bf16 %v128
  %v139 = vunpack.c.l.bf16 %v129
  %v140 = vunpack.c.h.bf16 %v129
  %v141 = vunpack.c.l.bf16 %v130
  %v142 = vunpack.c.h.bf16 %v130
  %v143 = vunpack.c.l.bf16 %v131
  %v144 = vunpack.c.h.bf16 %v131
  %v145 = vunpack.c.l.bf16 %v132
  %v146 = vunpack.c.h.bf16 %v132
  %v147 = vunpack.c.l.bf16 %v133
  %v148 = vunpack.c.h.bf16 %v133
  %v149 = vunpack.c.l.bf16 %v134
  %v150 = vunpack.c.h.bf16 %v134
  %v151 = vxor.u32 %v111, 2147483648
  %v152 = vxor.u32 %v112, 2147483648
  %v153 = vxor.u32 %v113, 2147483648
  %v154 = vxor.u32 %v114, 2147483648
  %v155 = vxor.u32 %v115, 2147483648
  %v156 = vxor.u32 %v116, 2147483648
  %v157 = vxor.u32 %v117, 2147483648
  %v158 = vxor.u32 %v118, 2147483648
  %v159 = vxor.u32 %v119, 2147483648
  %v160 = vxor.u32 %v120, 2147483648
  %v161 = vxor.u32 %v121, 2147483648
  %v162 = vxor.u32 %v122, 2147483648
  %v163 = vxor.u32 %v123, 2147483648
  %v164 = vxor.u32 %v124, 2147483648
  %v165 = vxor.u32 %v125, 2147483648
  %v166 = vxor.u32 %v126, 2147483648
  %v167 = vmul.f32 %v151, 1.442695
  %v168 = vpow.pop %v167
  %v169 = vmul.f32 %v152, 1.442695
  %v170 = vpow.pop %v169
  %v171 = vmul.f32 %v153, 1.442695
  %v172 = vpow.pop %v171
  %v173 = vmul.f32 %v154, 1.442695
  %v174 = vpow.pop %v173
  %v175 = vmul.f32 %v155, 1.442695
  %v176 = vpow.pop %v175
  %v177 = vmul.f32 %v156, 1.442695
  %v178 = vpow.pop %v177
  %v179 = vmul.f32 %v157, 1.442695
  %v180 = vpow.pop %v179
  %v181 = vmul.f32 %v158, 1.442695
  %v182 = vpow.pop %v181
  %v183 = vmul.f32 %v159, 1.442695
  %v184 = vpow.pop %v183
  %v185 = vmul.f32 %v160, 1.442695
  %v186 = vpow.pop %v185
  %v187 = vmul.f32 %v161, 1.442695
  %v188 = vpow.pop %v187
  %v189 = vmul.f32 %v162, 1.442695
  %v190 = vpow.pop %v189
  %v191 = vmul.f32 %v163, 1.442695
  %v192 = vpow.pop %v191
  %v193 = vmul.f32 %v164, 1.442695
  %v194 = vpow.pop %v193
  %v195 = vmul.f32 %v165, 1.442695
  %v196 = vpow.pop %v195
  %v197 = vmul.f32 %v166, 1.442695
  %v198 = vpow.pop %v197
  %v199 = vadd.f32 %v168, 1.0
  %v200 = vadd.f32 %v170, 1.0
  %v201 = vadd.f32 %v172, 1.0
  %v202 = vadd.f32 %v174, 1.0
  %v203 = vadd.f32 %v176, 1.0
  %v204 = vadd.f32 %v178, 1.0
  %v205 = vadd.f32 %v180, 1.0
  %v206 = vadd.f32 %v182, 1.0
  %v207 = vadd.f32 %v184, 1.0
  %v208 = vadd.f32 %v186, 1.0
  %v209 = vadd.f32 %v188, 1.0
  %v210 = vadd.f32 %v190, 1.0
  %v211 = vadd.f32 %v192, 1.0
  %v212 = vadd.f32 %v194, 1.0
  %v213 = vadd.f32 %v196, 1.0
  %v214 = vadd.f32 %v198, 1.0
  %v215 = vrcp.pop %v199
  %v216 = vmul.f32 %v199, %v215
  %v217 = vsub.f32 1.0, %v216
  %v218 = vmul.f32 %v215, %v217
  %v219 = vadd.f32 %v215, %v218
  %vm220 = vweird.f32 %v199
  %vm221 = vweird.f32 %v215
  %vm222 = vmor %vm220, %vm221
  %v223 = vsel %vm222, %v215, %v219
  %v224 = vand.u32 2147483647, %v199
  %vm225 = vcmp.eq.f32.partialorder %v224, 8.507059e+37
  %v226 = vand.u32 %v199, 2147483648
  %v227 = vor.u32 1.1754944e-38, %v226
  %v228 = vsel %vm225, %v227, %v223
  %v229 = vmul.f32 1.0, %v228
  %v230 = vrcp.pop %v200
  %v231 = vmul.f32 %v200, %v230
  %v232 = vsub.f32 1.0, %v231
  %v233 = vmul.f32 %v230, %v232
  %v234 = vadd.f32 %v230, %v233
  %vm235 = vweird.f32 %v200
  %vm236 = vweird.f32 %v230
  %vm237 = vmor %vm235, %vm236
  %v238 = vsel %vm237, %v230, %v234
  %v239 = vand.u32 2147483647, %v200
  %vm240 = vcmp.eq.f32.partialorder %v239, 8.507059e+37
  %v241 = vand.u32 %v200, 2147483648
  %v242 = vor.u32 1.1754944e-38, %v241
  %v243 = vsel %vm240, %v242, %v238
  %v244 = vmul.f32 1.0, %v243
  %v245 = vrcp.pop %v201
  %v246 = vmul.f32 %v201, %v245
  %v247 = vsub.f32 1.0, %v246
  %v248 = vmul.f32 %v245, %v247
  %v249 = vadd.f32 %v245, %v248
  %vm250 = vweird.f32 %v201
  %vm251 = vweird.f32 %v245
  %vm252 = vmor %vm250, %vm251
  %v253 = vsel %vm252, %v245, %v249
  %v254 = vand.u32 2147483647, %v201
  %vm255 = vcmp.eq.f32.partialorder %v254, 8.507059e+37
  %v256 = vand.u32 %v201, 2147483648
  %v257 = vor.u32 1.1754944e-38, %v256
  %v258 = vsel %vm255, %v257, %v253
  %v259 = vmul.f32 1.0, %v258
  %v260 = vrcp.pop %v202
  %v261 = vmul.f32 %v202, %v260
  %v262 = vsub.f32 1.0, %v261
  %v263 = vmul.f32 %v260, %v262
  %v264 = vadd.f32 %v260, %v263
  %vm265 = vweird.f32 %v202
  %vm266 = vweird.f32 %v260
  %vm267 = vmor %vm265, %vm266
  %v268 = vsel %vm267, %v260, %v264
  %v269 = vand.u32 2147483647, %v202
  %vm270 = vcmp.eq.f32.partialorder %v269, 8.507059e+37
  %v271 = vand.u32 %v202, 2147483648
  %v272 = vor.u32 1.1754944e-38, %v271
  %v273 = vsel %vm270, %v272, %v268
  %v274 = vmul.f32 1.0, %v273
  %v275 = vrcp.pop %v203
  %v276 = vmul.f32 %v203, %v275
  %v277 = vsub.f32 1.0, %v276
  %v278 = vmul.f32 %v275, %v277
  %v279 = vadd.f32 %v275, %v278
  %vm280 = vweird.f32 %v203
  %vm281 = vweird.f32 %v275
  %vm282 = vmor %vm280, %vm281
  %v283 = vsel %vm282, %v275, %v279
  %v284 = vand.u32 2147483647, %v203
  %vm285 = vcmp.eq.f32.partialorder %v284, 8.507059e+37
  %v286 = vand.u32 %v203, 2147483648
  %v287 = vor.u32 1.1754944e-38, %v286
  %v288 = vsel %vm285, %v287, %v283
  %v289 = vmul.f32 1.0, %v288
  %v290 = vrcp.pop %v204
  %v291 = vmul.f32 %v204, %v290
  %v292 = vsub.f32 1.0, %v291
  %v293 = vmul.f32 %v290, %v292
  %v294 = vadd.f32 %v290, %v293
  %vm295 = vweird.f32 %v204
  %vm296 = vweird.f32 %v290
  %vm297 = vmor %vm295, %vm296
  %v298 = vsel %vm297, %v290, %v294
  %v299 = vand.u32 2147483647, %v204
  %vm300 = vcmp.eq.f32.partialorder %v299, 8.507059e+37
  %v301 = vand.u32 %v204, 2147483648
  %v302 = vor.u32 1.1754944e-38, %v301
  %v303 = vsel %vm300, %v302, %v298
  %v304 = vmul.f32 1.0, %v303
  %v305 = vrcp.pop %v205
  %v306 = vmul.f32 %v205, %v305
  %v307 = vsub.f32 1.0, %v306
  %v308 = vmul.f32 %v305, %v307
  %v309 = vadd.f32 %v305, %v308
  %vm310 = vweird.f32 %v205
  %vm311 = vweird.f32 %v305
  %vm312 = vmor %vm310, %vm311
  %v313 = vsel %vm312, %v305, %v309
  %v314 = vand.u32 2147483647, %v205
  %vm315 = vcmp.eq.f32.partialorder %v314, 8.507059e+37
  %v316 = vand.u32 %v205, 2147483648
  %v317 = vor.u32 1.1754944e-38, %v316
  %v318 = vsel %vm315, %v317, %v313
  %v319 = vmul.f32 1.0, %v318
  %v320 = vrcp.pop %v206
  %v321 = vmul.f32 %v206, %v320
  %v322 = vsub.f32 1.0, %v321
  %v323 = vmul.f32 %v320, %v322
  %v324 = vadd.f32 %v320, %v323
  %vm325 = vweird.f32 %v206
  %vm326 = vweird.f32 %v320
  %vm327 = vmor %vm325, %vm326
  %v328 = vsel %vm327, %v320, %v324
  %v329 = vand.u32 2147483647, %v206
  %vm330 = vcmp.eq.f32.partialorder %v329, 8.507059e+37
  %v331 = vand.u32 %v206, 2147483648
  %v332 = vor.u32 1.1754944e-38, %v331
  %v333 = vsel %vm330, %v332, %v328
  %v334 = vmul.f32 1.0, %v333
  %v335 = vrcp.pop %v207
  %v336 = vmul.f32 %v207, %v335
  %v337 = vsub.f32 1.0, %v336
  %v338 = vmul.f32 %v335, %v337
  %v339 = vadd.f32 %v335, %v338
  %vm340 = vweird.f32 %v207
  %vm341 = vweird.f32 %v335
  %vm342 = vmor %vm340, %vm341
  %v343 = vsel %vm342, %v335, %v339
  %v344 = vand.u32 2147483647, %v207
  %vm345 = vcmp.eq.f32.partialorder %v344, 8.507059e+37
  %v346 = vand.u32 %v207, 2147483648
  %v347 = vor.u32 1.1754944e-38, %v346
  %v348 = vsel %vm345, %v347, %v343
  %v349 = vmul.f32 1.0, %v348
  %v350 = vrcp.pop %v208
  %v351 = vmul.f32 %v208, %v350
  %v352 = vsub.f32 1.0, %v351
  %v353 = vmul.f32 %v350, %v352
  %v354 = vadd.f32 %v350, %v353
  %vm355 = vweird.f32 %v208
  %vm356 = vweird.f32 %v350
  %vm357 = vmor %vm355, %vm356
  %v358 = vsel %vm357, %v350, %v354
  %v359 = vand.u32 2147483647, %v208
  %vm360 = vcmp.eq.f32.partialorder %v359, 8.507059e+37
  %v361 = vand.u32 %v208, 2147483648
  %v362 = vor.u32 1.1754944e-38, %v361
  %v363 = vsel %vm360, %v362, %v358
  %v364 = vmul.f32 1.0, %v363
  %v365 = vrcp.pop %v209
  %v366 = vmul.f32 %v209, %v365
  %v367 = vsub.f32 1.0, %v366
  %v368 = vmul.f32 %v365, %v367
  %v369 = vadd.f32 %v365, %v368
  %vm370 = vweird.f32 %v209
  %vm371 = vweird.f32 %v365
  %vm372 = vmor %vm370, %vm371
  %v373 = vsel %vm372, %v365, %v369
  %v374 = vand.u32 2147483647, %v209
  %vm375 = vcmp.eq.f32.partialorder %v374, 8.507059e+37
  %v376 = vand.u32 %v209, 2147483648
  %v377 = vor.u32 1.1754944e-38, %v376
  %v378 = vsel %vm375, %v377, %v373
  %v379 = vmul.f32 1.0, %v378
  %v380 = vrcp.pop %v210
  %v381 = vmul.f32 %v210, %v380
  %v382 = vsub.f32 1.0, %v381
  %v383 = vmul.f32 %v380, %v382
  %v384 = vadd.f32 %v380, %v383
  %vm385 = vweird.f32 %v210
  %vm386 = vweird.f32 %v380
  %vm387 = vmor %vm385, %vm386
  %v388 = vsel %vm387, %v380, %v384
  %v389 = vand.u32 2147483647, %v210
  %vm390 = vcmp.eq.f32.partialorder %v389, 8.507059e+37
  %v391 = vand.u32 %v210, 2147483648
  %v392 = vor.u32 1.1754944e-38, %v391
  %v393 = vsel %vm390, %v392, %v388
  %v394 = vmul.f32 1.0, %v393
  %v395 = vrcp.pop %v211
  %v396 = vmul.f32 %v211, %v395
  %v397 = vsub.f32 1.0, %v396
  %v398 = vmul.f32 %v395, %v397
  %v399 = vadd.f32 %v395, %v398
  %vm400 = vweird.f32 %v211
  %vm401 = vweird.f32 %v395
  %vm402 = vmor %vm400, %vm401
  %v403 = vsel %vm402, %v395, %v399
  %v404 = vand.u32 2147483647, %v211
  %vm405 = vcmp.eq.f32.partialorder %v404, 8.507059e+37
  %v406 = vand.u32 %v211, 2147483648
  %v407 = vor.u32 1.1754944e-38, %v406
  %v408 = vsel %vm405, %v407, %v403
  %v409 = vmul.f32 1.0, %v408
  %v410 = vrcp.pop %v212
  %v411 = vmul.f32 %v212, %v410
  %v412 = vsub.f32 1.0, %v411
  %v413 = vmul.f32 %v410, %v412
  %v414 = vadd.f32 %v410, %v413
  %vm415 = vweird.f32 %v212
  %vm416 = vweird.f32 %v410
  %vm417 = vmor %vm415, %vm416
  %v418 = vsel %vm417, %v410, %v414
  %v419 = vand.u32 2147483647, %v212
  %vm420 = vcmp.eq.f32.partialorder %v419, 8.507059e+37
  %v421 = vand.u32 %v212, 2147483648
  %v422 = vor.u32 1.1754944e-38, %v421
  %v423 = vsel %vm420, %v422, %v418
  %v424 = vmul.f32 1.0, %v423
  %v425 = vrcp.pop %v213
  %v426 = vmul.f32 %v213, %v425
  %v427 = vsub.f32 1.0, %v426
  %v428 = vmul.f32 %v425, %v427
  %v429 = vadd.f32 %v425, %v428
  %vm430 = vweird.f32 %v213
  %vm431 = vweird.f32 %v425
  %vm432 = vmor %vm430, %vm431
  %v433 = vsel %vm432, %v425, %v429
  %v434 = vand.u32 2147483647, %v213
  %vm435 = vcmp.eq.f32.partialorder %v434, 8.507059e+37
  %v436 = vand.u32 %v213, 2147483648
  %v437 = vor.u32 1.1754944e-38, %v436
  %v438 = vsel %vm435, %v437, %v433
  %v439 = vmul.f32 1.0, %v438
  %v440 = vrcp.pop %v214
  %v441 = vmul.f32 %v214, %v440
  %v442 = vsub.f32 1.0, %v441
  %v443 = vmul.f32 %v440, %v442
  %v444 = vadd.f32 %v440, %v443
  %vm445 = vweird.f32 %v214
  %vm446 = vweird.f32 %v440
  %vm447 = vmor %vm445, %vm446
  %v448 = vsel %vm447, %v440, %v444
  %v449 = vand.u32 2147483647, %v214
  %vm450 = vcmp.eq.f32.partialorder %v449, 8.507059e+37
  %v451 = vand.u32 %v214, 2147483648
  %v452 = vor.u32 1.1754944e-38, %v451
  %v453 = vsel %vm450, %v452, %v448
  %v454 = vmul.f32 1.0, %v453
  %v455 = vld [vmem:[#allocation2] sm:$0xff]
  %v456 = vld [vmem:[#allocation2 + $0x8] sm:$0xff]
  %v457 = vld [vmem:[#allocation2 + $0x10] sm:$0xff]
  %v458 = vld [vmem:[#allocation2 + $0x18] sm:$0xff]
  %v459 = vld [vmem:[#allocation2 + $0x20] sm:$0xff]
  %v460 = vld [vmem:[#allocation2 + $0x28] sm:$0xff]
  %v461 = vld [vmem:[#allocation2 + $0x30] sm:$0xff]
  %v462 = vld [vmem:[#allocation2 + $0x38] sm:$0xff]
  %v463 = vld [vmem:[#allocation2 + $0x40] sm:$0xff]
  %v464 = vld [vmem:[#allocation2 + $0x48] sm:$0xff]
  %v465 = vld [vmem:[#allocation2 + $0x50] sm:$0xff]
  %v466 = vld [vmem:[#allocation2 + $0x58] sm:$0xff]
  %v467 = vld [vmem:[#allocation2 + $0x60] sm:$0xff]
  %v468 = vld [vmem:[#allocation2 + $0x68] sm:$0xff]
  %v469 = vld [vmem:[#allocation2 + $0x70] sm:$0xff]
  %v470 = vld [vmem:[#allocation2 + $0x78] sm:$0xff]
  %v471 = vmul.f32 %v229, %v135
  %v472 = vmul.f32 %v244, %v136
  %v473 = vmul.f32 %v259, %v137
  %v474 = vmul.f32 %v274, %v138
  %v475 = vmul.f32 %v289, %v139
  %v476 = vmul.f32 %v304, %v140
  %v477 = vmul.f32 %v319, %v141
  %v478 = vmul.f32 %v334, %v142
  %v479 = vmul.f32 %v349, %v143
  %v480 = vmul.f32 %v364, %v144
  %v481 = vmul.f32 %v379, %v145
  %v482 = vmul.f32 %v394, %v146
  %v483 = vmul.f32 %v409, %v147
  %v484 = vmul.f32 %v424, %v148
  %v485 = vmul.f32 %v439, %v149
  %v486 = vmul.f32 %v454, %v150
  %v487 = vadd.f32 %v471, 0.0
  %v488 = vadd.f32 %v472, 0.0
  %v489 = vadd.f32 %v473, 0.0
  %v490 = vadd.f32 %v474, 0.0
  %v491 = vadd.f32 %v475, 0.0
  %v492 = vadd.f32 %v476, 0.0
  %v493 = vadd.f32 %v477, 0.0
  %v494 = vadd.f32 %v478, 0.0
  %v495 = vadd.f32 %v479, 0.0
  %v496 = vadd.f32 %v480, 0.0
  %v497 = vadd.f32 %v481, 0.0
  %v498 = vadd.f32 %v482, 0.0
  %v499 = vadd.f32 %v483, 0.0
  %v500 = vadd.f32 %v484, 0.0
  %v501 = vadd.f32 %v485, 0.0
  %v502 = vadd.f32 %v486, 0.0
  %v503 = vadd.f32 %v455, %v487
  %v504 = vadd.f32 %v456, %v488
  %v505 = vadd.f32 %v457, %v489
  %v506 = vadd.f32 %v458, %v490
  %v507 = vadd.f32 %v459, %v491
  %v508 = vadd.f32 %v460, %v492
  %v509 = vadd.f32 %v461, %v493
  %v510 = vadd.f32 %v462, %v494
  %v511 = vadd.f32 %v463, %v495
  %v512 = vadd.f32 %v464, %v496
  %v513 = vadd.f32 %v465, %v497
  %v514 = vadd.f32 %v466, %v498
  %v515 = vadd.f32 %v467, %v499
  %v516 = vadd.f32 %v468, %v500
  %v517 = vadd.f32 %v469, %v501
  %v518 = vadd.f32 %v470, %v502
  %519 = vst [vmem:[#allocation2] sm:$0xff] %v503
  %520 = vst [vmem:[#allocation2 + $0x8] sm:$0xff] %v504
  %521 = vst [vmem:[#allocation2 + $0x10] sm:$0xff] %v505
  %522 = vst [vmem:[#allocation2 + $0x18] sm:$0xff] %v506
  %523 = vst [vmem:[#allocation2 + $0x20] sm:$0xff] %v507
  %524 = vst [vmem:[#allocation2 + $0x28] sm:$0xff] %v508
  %525 = vst [vmem:[#allocation2 + $0x30] sm:$0xff] %v509
  %526 = vst [vmem:[#allocation2 + $0x38] sm:$0xff] %v510
  %527 = vst [vmem:[#allocation2 + $0x40] sm:$0xff] %v511
  %528 = vst [vmem:[#allocation2 + $0x48] sm:$0xff] %v512
  %529 = vst [vmem:[#allocation2 + $0x50] sm:$0xff] %v513
  %530 = vst [vmem:[#allocation2 + $0x58] sm:$0xff] %v514
  %531 = vst [vmem:[#allocation2 + $0x60] sm:$0xff] %v515
  %532 = vst [vmem:[#allocation2 + $0x68] sm:$0xff] %v516
  %533 = vst [vmem:[#allocation2 + $0x70] sm:$0xff] %v517
  %534 = vst [vmem:[#allocation2 + $0x78] sm:$0xff] %v518
  %v535 = vld [vmem:[#allocation3] sm:$0xff]
  %v536 = vld [vmem:[#allocation3 + $0x8] sm:$0xff]
  %v537 = vld [vmem:[#allocation3 + $0x10] sm:$0xff]
  %v538 = vld [vmem:[#allocation3 + $0x18] sm:$0xff]
  %v539 = vld [vmem:[#allocation3 + $0x20] sm:$0xff]
  %v540 = vld [vmem:[#allocation3 + $0x28] sm:$0xff]
  %v541 = vld [vmem:[#allocation3 + $0x30] sm:$0xff]
  %v542 = vld [vmem:[#allocation3 + $0x38] sm:$0xff]
  %v543 = vld [vmem:[#allocation3 + $0x40] sm:$0xff]
  %v544 = vld [vmem:[#allocation3 + $0x48] sm:$0xff]
  %v545 = vld [vmem:[#allocation3 + $0x50] sm:$0xff]
  %v546 = vld [vmem:[#allocation3 + $0x58] sm:$0xff]
  %v547 = vld [vmem:[#allocation3 + $0x60] sm:$0xff]
  %v548 = vld [vmem:[#allocation3 + $0x68] sm:$0xff]
  %v549 = vld [vmem:[#allocation3 + $0x70] sm:$0xff]
  %v550 = vld [vmem:[#allocation3 + $0x78] sm:$0xff]
  %v551 = vadd.f32 %v229, 0.0
  %v552 = vadd.f32 %v244, 0.0
  %v553 = vadd.f32 %v259, 0.0
  %v554 = vadd.f32 %v274, 0.0
  %v555 = vadd.f32 %v289, 0.0
  %v556 = vadd.f32 %v304, 0.0
  %v557 = vadd.f32 %v319, 0.0
  %v558 = vadd.f32 %v334, 0.0
  %v559 = vadd.f32 %v349, 0.0
  %v560 = vadd.f32 %v364, 0.0
  %v561 = vadd.f32 %v379, 0.0
  %v562 = vadd.f32 %v394, 0.0
  %v563 = vadd.f32 %v409, 0.0
  %v564 = vadd.f32 %v424, 0.0
  %v565 = vadd.f32 %v439, 0.0
  %v566 = vadd.f32 %v454, 0.0
  %v567 = vadd.f32 %v535, %v551
  %v568 = vadd.f32 %v536, %v552
  %v569 = vadd.f32 %v537, %v553
  %v570 = vadd.f32 %v538, %v554
  %v571 = vadd.f32 %v539, %v555
  %v572 = vadd.f32 %v540, %v556
  %v573 = vadd.f32 %v541, %v557
  %v574 = vadd.f32 %v542, %v558
  %v575 = vadd.f32 %v543, %v559
  %v576 = vadd.f32 %v544, %v560
  %v577 = vadd.f32 %v545, %v561
  %v578 = vadd.f32 %v546, %v562
  %v579 = vadd.f32 %v547, %v563
  %v580 = vadd.f32 %v548, %v564
  %v581 = vadd.f32 %v549, %v565
  %v582 = vadd.f32 %v550, %v566
  %583 = vst [vmem:[#allocation3] sm:$0xff] %v567
  %584 = vst [vmem:[#allocation3 + $0x8] sm:$0xff] %v568
  %585 = vst [vmem:[#allocation3 + $0x10] sm:$0xff] %v569
  %586 = vst [vmem:[#allocation3 + $0x18] sm:$0xff] %v570
  %587 = vst [vmem:[#allocation3 + $0x20] sm:$0xff] %v571
  %588 = vst [vmem:[#allocation3 + $0x28] sm:$0xff] %v572
  %589 = vst [vmem:[#allocation3 + $0x30] sm:$0xff] %v573
  %590 = vst [vmem:[#allocation3 + $0x38] sm:$0xff] %v574
  %591 = vst [vmem:[#allocation3 + $0x40] sm:$0xff] %v575
  %592 = vst [vmem:[#allocation3 + $0x48] sm:$0xff] %v576
  %593 = vst [vmem:[#allocation3 + $0x50] sm:$0xff] %v577
  %594 = vst [vmem:[#allocation3 + $0x58] sm:$0xff] %v578
  %595 = vst [vmem:[#allocation3 + $0x60] sm:$0xff] %v579
  %596 = vst [vmem:[#allocation3 + $0x68] sm:$0xff] %v580
  %597 = vst [vmem:[#allocation3 + $0x70] sm:$0xff] %v581
  %598 = vst [vmem:[#allocation3 + $0x78] sm:$0xff] %v582
  %v599 = vld [vmem:[#allocation4] sm:$0xff]
  %v600 = vld [vmem:[#allocation4 + $0x8] sm:$0xff]
  %v601 = vld [vmem:[#allocation4 + $0x10] sm:$0xff]
  %v602 = vld [vmem:[#allocation4 + $0x18] sm:$0xff]
  %v603 = vld [vmem:[#allocation4 + $0x20] sm:$0xff]
  %v604 = vld [vmem:[#allocation4 + $0x28] sm:$0xff]
  %v605 = vld [vmem:[#allocation4 + $0x30] sm:$0xff]
  %v606 = vld [vmem:[#allocation4 + $0x38] sm:$0xff]
  %v607 = vld [vmem:[#allocation4 + $0x40] sm:$0xff]
  %v608 = vld [vmem:[#allocation4 + $0x48] sm:$0xff]
  %v609 = vld [vmem:[#allocation4 + $0x50] sm:$0xff]
  %v610 = vld [vmem:[#allocation4 + $0x58] sm:$0xff]
  %v611 = vld [vmem:[#allocation4 + $0x60] sm:$0xff]
  %v612 = vld [vmem:[#allocation4 + $0x68] sm:$0xff]
  %v613 = vld [vmem:[#allocation4 + $0x70] sm:$0xff]
  %v614 = vld [vmem:[#allocation4 + $0x78] sm:$0xff]
  %v615 = vadd.f32 %v135, 0.0
  %v616 = vadd.f32 %v136, 0.0
  %v617 = vadd.f32 %v137, 0.0
  %v618 = vadd.f32 %v138, 0.0
  %v619 = vadd.f32 %v139, 0.0
  %v620 = vadd.f32 %v140, 0.0
  %v621 = vadd.f32 %v141, 0.0
  %v622 = vadd.f32 %v142, 0.0
  %v623 = vadd.f32 %v143, 0.0
  %v624 = vadd.f32 %v144, 0.0
  %v625 = vadd.f32 %v145, 0.0
  %v626 = vadd.f32 %v146, 0.0
  %v627 = vadd.f32 %v147, 0.0
  %v628 = vadd.f32 %v148, 0.0
  %v629 = vadd.f32 %v149, 0.0
  %v630 = vadd.f32 %v150, 0.0
  %v631 = vadd.f32 %v599, %v615
  %v632 = vadd.f32 %v600, %v616
  %v633 = vadd.f32 %v601, %v617
  %v634 = vadd.f32 %v602, %v618
  %v635 = vadd.f32 %v603, %v619
  %v636 = vadd.f32 %v604, %v620
  %v637 = vadd.f32 %v605, %v621
  %v638 = vadd.f32 %v606, %v622
  %v639 = vadd.f32 %v607, %v623
  %v640 = vadd.f32 %v608, %v624
  %v641 = vadd.f32 %v609, %v625
  %v642 = vadd.f32 %v610, %v626
  %v643 = vadd.f32 %v611, %v627
  %v644 = vadd.f32 %v612, %v628
  %v645 = vadd.f32 %v613, %v629
  %v646 = vadd.f32 %v614, %v630
  %647 = vst [vmem:[#allocation4] sm:$0xff] %v631
  %648 = vst [vmem:[#allocation4 + $0x8] sm:$0xff] %v632
  %649 = vst [vmem:[#allocation4 + $0x10] sm:$0xff] %v633
  %650 = vst [vmem:[#allocation4 + $0x18] sm:$0xff] %v634
  %651 = vst [vmem:[#allocation4 + $0x20] sm:$0xff] %v635
  %652 = vst [vmem:[#allocation4 + $0x28] sm:$0xff] %v636
  %653 = vst [vmem:[#allocation4 + $0x30] sm:$0xff] %v637
  %654 = vst [vmem:[#allocation4 + $0x38] sm:$0xff] %v638
  %655 = vst [vmem:[#allocation4 + $0x40] sm:$0xff] %v639
  %656 = vst [vmem:[#allocation4 + $0x48] sm:$0xff] %v640
  %657 = vst [vmem:[#allocation4 + $0x50] sm:$0xff] %v641
  %658 = vst [vmem:[#allocation4 + $0x58] sm:$0xff] %v642
  %659 = vst [vmem:[#allocation4 + $0x60] sm:$0xff] %v643
  %660 = vst [vmem:[#allocation4 + $0x68] sm:$0xff] %v644
  %661 = vst [vmem:[#allocation4 + $0x70] sm:$0xff] %v645
  %662 = vst [vmem:[#allocation4 + $0x78] sm:$0xff] %v646
  // Predicated region
  $region14: #{dice_loss.1} parent=0 // pred_check
    %p663 = pneg %p51
  $region15: #{dice_loss.1} parent=0 // pred_check_branch
    %665 = sbr.rel (%p663) target = $region17
  $region16: #{dice_loss.1} parent=0 // pred_region
    %v666 = vld [vmem:[#allocation2] sm:$0xff]
    %v667 = vld [vmem:[#allocation2 + $0x8] sm:$0xff]
    %v668 = vld [vmem:[#allocation2 + $0x10] sm:$0xff]
    %v669 = vld [vmem:[#allocation2 + $0x18] sm:$0xff]
    %v670 = vld [vmem:[#allocation2 + $0x20] sm:$0xff]
    %v671 = vld [vmem:[#allocation2 + $0x28] sm:$0xff]
    %v672 = vld [vmem:[#allocation2 + $0x30] sm:$0xff]
    %v673 = vld [vmem:[#allocation2 + $0x38] sm:$0xff]
    %v674 = vld [vmem:[#allocation2 + $0x40] sm:$0xff]
    %v675 = vld [vmem:[#allocation2 + $0x48] sm:$0xff]
    %v676 = vld [vmem:[#allocation2 + $0x50] sm:$0xff]
    %v677 = vld [vmem:[#allocation2 + $0x58] sm:$0xff]
    %v678 = vld [vmem:[#allocation2 + $0x60] sm:$0xff]
    %v679 = vld [vmem:[#allocation2 + $0x68] sm:$0xff]
    %v680 = vld [vmem:[#allocation2 + $0x70] sm:$0xff]
    %v681 = vld [vmem:[#allocation2 + $0x78] sm:$0xff]
    %682 = vst [vmem:[%s2] sm:$0xff] %v666
    %683 = vst [vmem:[%s2 + $0x8] sm:$0xff] %v667
    %684 = vst [vmem:[%s2 + $0x10] sm:$0xff] %v668
    %685 = vst [vmem:[%s2 + $0x18] sm:$0xff] %v669
    %686 = vst [vmem:[%s2 + $0x20] sm:$0xff] %v670
    %687 = vst [vmem:[%s2 + $0x28] sm:$0xff] %v671
    %688 = vst [vmem:[%s2 + $0x30] sm:$0xff] %v672
    %689 = vst [vmem:[%s2 + $0x38] sm:$0xff] %v673
    %690 = vst [vmem:[%s2 + $0x40] sm:$0xff] %v674
    %691 = vst [vmem:[%s2 + $0x48] sm:$0xff] %v675
    %692 = vst [vmem:[%s2 + $0x50] sm:$0xff] %v676
    %693 = vst [vmem:[%s2 + $0x58] sm:$0xff] %v677
    %694 = vst [vmem:[%s2 + $0x60] sm:$0xff] %v678
    %695 = vst [vmem:[%s2 + $0x68] sm:$0xff] %v679
    %696 = vst [vmem:[%s2 + $0x70] sm:$0xff] %v680
    %697 = vst [vmem:[%s2 + $0x78] sm:$0xff] %v681
    %v698 = vld [vmem:[#allocation3] sm:$0xff]
    %v699 = vld [vmem:[#allocation3 + $0x8] sm:$0xff]
    %v700 = vld [vmem:[#allocation3 + $0x10] sm:$0xff]
    %v701 = vld [vmem:[#allocation3 + $0x18] sm:$0xff]
    %v702 = vld [vmem:[#allocation3 + $0x20] sm:$0xff]
    %v703 = vld [vmem:[#allocation3 + $0x28] sm:$0xff]
    %v704 = vld [vmem:[#allocation3 + $0x30] sm:$0xff]
    %v705 = vld [vmem:[#allocation3 + $0x38] sm:$0xff]
    %v706 = vld [vmem:[#allocation3 + $0x40] sm:$0xff]
    %v707 = vld [vmem:[#allocation3 + $0x48] sm:$0xff]
    %v708 = vld [vmem:[#allocation3 + $0x50] sm:$0xff]
    %v709 = vld [vmem:[#allocation3 + $0x58] sm:$0xff]
    %v710 = vld [vmem:[#allocation3 + $0x60] sm:$0xff]
    %v711 = vld [vmem:[#allocation3 + $0x68] sm:$0xff]
    %v712 = vld [vmem:[#allocation3 + $0x70] sm:$0xff]
    %v713 = vld [vmem:[#allocation3 + $0x78] sm:$0xff]
    %s714 = scalar_lea.vmem %s2, 128
    %715 = vst [vmem:[%s714] sm:$0xff] %v698
    %716 = vst [vmem:[%s714 + $0x8] sm:$0xff] %v699
    %717 = vst [vmem:[%s714 + $0x10] sm:$0xff] %v700
    %718 = vst [vmem:[%s714 + $0x18] sm:$0xff] %v701
    %719 = vst [vmem:[%s714 + $0x20] sm:$0xff] %v702
    %720 = vst [vmem:[%s714 + $0x28] sm:$0xff] %v703
    %721 = vst [vmem:[%s714 + $0x30] sm:$0xff] %v704
    %722 = vst [vmem:[%s714 + $0x38] sm:$0xff] %v705
    %723 = vst [vmem:[%s714 + $0x40] sm:$0xff] %v706
    %724 = vst [vmem:[%s714 + $0x48] sm:$0xff] %v707
    %725 = vst [vmem:[%s714 + $0x50] sm:$0xff] %v708
    %726 = vst [vmem:[%s714 + $0x58] sm:$0xff] %v709
    %727 = vst [vmem:[%s714 + $0x60] sm:$0xff] %v710
    %728 = vst [vmem:[%s714 + $0x68] sm:$0xff] %v711
    %729 = vst [vmem:[%s714 + $0x70] sm:$0xff] %v712
    %730 = vst [vmem:[%s714 + $0x78] sm:$0xff] %v713
    %v731 = vld [vmem:[#allocation4] sm:$0xff]
    %v732 = vld [vmem:[#allocation4 + $0x8] sm:$0xff]
    %v733 = vld [vmem:[#allocation4 + $0x10] sm:$0xff]
    %v734 = vld [vmem:[#allocation4 + $0x18] sm:$0xff]
    %v735 = vld [vmem:[#allocation4 + $0x20] sm:$0xff]
    %v736 = vld [vmem:[#allocation4 + $0x28] sm:$0xff]
    %v737 = vld [vmem:[#allocation4 + $0x30] sm:$0xff]
    %v738 = vld [vmem:[#allocation4 + $0x38] sm:$0xff]
    %v739 = vld [vmem:[#allocation4 + $0x40] sm:$0xff]
    %v740 = vld [vmem:[#allocation4 + $0x48] sm:$0xff]
    %v741 = vld [vmem:[#allocation4 + $0x50] sm:$0xff]
    %v742 = vld [vmem:[#allocation4 + $0x58] sm:$0xff]
    %v743 = vld [vmem:[#allocation4 + $0x60] sm:$0xff]
    %v744 = vld [vmem:[#allocation4 + $0x68] sm:$0xff]
    %v745 = vld [vmem:[#allocation4 + $0x70] sm:$0xff]
    %v746 = vld [vmem:[#allocation4 + $0x78] sm:$0xff]
    %s747 = scalar_lea.vmem %s2, 256
    %748 = vst [vmem:[%s747] sm:$0xff] %v731
    %749 = vst [vmem:[%s747 + $0x8] sm:$0xff] %v732
    %750 = vst [vmem:[%s747 + $0x10] sm:$0xff] %v733
    %751 = vst [vmem:[%s747 + $0x18] sm:$0xff] %v734
    %752 = vst [vmem:[%s747 + $0x20] sm:$0xff] %v735
    %753 = vst [vmem:[%s747 + $0x28] sm:$0xff] %v736
    %754 = vst [vmem:[%s747 + $0x30] sm:$0xff] %v737
    %755 = vst [vmem:[%s747 + $0x38] sm:$0xff] %v738
    %756 = vst [vmem:[%s747 + $0x40] sm:$0xff] %v739
    %757 = vst [vmem:[%s747 + $0x48] sm:$0xff] %v740
    %758 = vst [vmem:[%s747 + $0x50] sm:$0xff] %v741
    %759 = vst [vmem:[%s747 + $0x58] sm:$0xff] %v742
    %760 = vst [vmem:[%s747 + $0x60] sm:$0xff] %v743
    %761 = vst [vmem:[%s747 + $0x68] sm:$0xff] %v744
    %762 = vst [vmem:[%s747 + $0x70] sm:$0xff] %v745
    %763 = vst [vmem:[%s747 + $0x78] sm:$0xff] %v746
  $region17: #{dice_loss.1} parent=0 // pred_fallthru
    _
  // Predicated region
  $region18: #{dice_loss.1} parent=0 // pred_check
    _
  $region19: #{dice_loss.1} parent=0 // pred_check_branch
    %765 = sbr.rel (0) target = $region21
  $region20: #{dice_loss.1} parent=0 // pred_region
    _
  $region21: #{dice_loss.1} parent=0 // pred_fallthru
    _
  // Predicated region
  $region22: #{dice_loss.1} parent=0 // pred_check
    _
  $region23: #{dice_loss.1} parent=0 // pred_check_branch
    %767 = sbr.rel (0) target = $region25
  $region24: #{dice_loss.1} parent=0 // pred_region
    _
  $region25: #{dice_loss.1} parent=0 // pred_fallthru
    _

</llo_original>
